<compile_context>
chip_gen: v7x
topology: tpu7x:2x2x1
jax: 0.10.0
libtpu: 0.0.40
codegen_flags: <defaults>
</compile_context>

<pallas_src>
import jax
import jax.numpy as jnp
from jax.experimental import pallas as pl
from jax.experimental.pallas import tpu as pltpu

LANE = 128
SUBLANE = 8


def _round_up(x, m):
    return ((x + m - 1) // m) * m


def _cdiv(a, b):
    return -(-a // b)


def mlp_kernel(x_ref, w1_ref, b1_ref, w2_ref, b2_ref, w3_ref, b3_ref, o_ref):
    # In-kernel f32 -> bf16 cast of the activations (cheap VPU work, no extra HBM pass).
    x = x_ref[...].astype(jnp.bfloat16)

    # fc1 + ReLU   (K = 13; MXU pads K internally)
    h1 = jnp.dot(x, w1_ref[...], preferred_element_type=jnp.float32) + b1_ref[...]
    h1 = jnp.maximum(h1, 0.0).astype(jnp.bfloat16)

    # fc2 + ReLU
    h2 = jnp.dot(h1, w2_ref[...], preferred_element_type=jnp.float32) + b2_ref[...]
    h2 = jnp.maximum(h2, 0.0).astype(jnp.bfloat16)

    # fc3: lane-dense (tb, 128) matmul against the zero-padded w3, then slice to the
    # real output width before bias/sigmoid/store (narrow store, no 64x amplification).
    logits128 = jnp.dot(h2, w3_ref[...], preferred_element_type=jnp.float32)
    out_dim = o_ref.shape[-1]
    z = logits128[:, :out_dim] + b3_ref[...]

    # sigmoid = 1 / (1 + exp(-z)); exp and the approximate reciprocal both run on the EUP.
    o_ref[...] = pl.reciprocal(1.0 + jnp.exp(-z), approx=True)


def prepare_params(params):
    """One-time pad + bf16 cast of the weights (call once, outside the jitted forward)."""
    w1, b1 = params["fc1"]
    w2, b2 = params["fc2"]
    w3, b3 = params["fc3"]
    hid = w1.shape[1]
    out_dim = w3.shape[1]
    out_pad = _round_up(out_dim, LANE)  # 2 -> 128 (lane-dense matmul operand)

    return {
        "w1": w1.astype(jnp.bfloat16),                                   # (13, 128)
        "b1": b1.reshape(1, -1).astype(jnp.float32),                     # (1, 128)
        "w2": w2.astype(jnp.bfloat16),                                   # (128, 128)
        "b2": b2.reshape(1, -1).astype(jnp.float32),                     # (1, 128)
        "w3": jnp.zeros((hid, out_pad), jnp.bfloat16)
                 .at[:, :out_dim].set(w3.astype(jnp.bfloat16)),          # (128, 128)
        "b3": b3.reshape(1, -1).astype(jnp.float32),                     # (1, 2) unpadded
    }


def _batch_tiling(B, tile_b):
    """Pick (tb, n_steps, b_pad) with bounded padding and >=2 steps for big batches."""
    n_steps = max(1, _cdiv(B, tile_b))
    if B > 128:
        # Ensure at least two parallel grid steps so both v7x TensorCores get work.
        n_steps = max(n_steps, 2)
    tb = _round_up(_cdiv(B, n_steps), SUBLANE)   # padding is < n_steps*8 rows
    b_pad = n_steps * tb
    return tb, n_steps, b_pad


def mlp_forward(x, prepared, *, tile_b=1024):
    """x: (B, input_dim) float32. prepared: output of prepare_params."""
    w1p, b1p = prepared["w1"], prepared["b1"]
    w2p, b2p = prepared["w2"], prepared["b2"]
    w3p, b3p = prepared["w3"], prepared["b3"]

    B, in_dim = x.shape
    hid = w1p.shape[1]
    out_dim = b3p.shape[1]
    out_pad = w3p.shape[1]

    tb, n_steps, b_pad = _batch_tiling(B, tile_b)

    # Only a (cheap) row pad when the tile doesn't divide B; no column pad, no dtype cast.
    x_in = x if b_pad == B else jnp.pad(x, ((0, b_pad - B), (0, 0)))

    flops = 2 * b_pad * (in_dim * hid + hid * hid + hid * out_pad)
    bytes_accessed = (
        x_in.size * 4
        + w1p.size * 2 + w2p.size * 2 + w3p.size * 2
        + b1p.size * 4 + b2p.size * 4 + b3p.size * 4
        + b_pad * out_dim * 4
    )
    cost = pl.CostEstimate(
        flops=flops,
        transcendentals=2 * b_pad * out_dim,   # exp + reciprocal
        bytes_accessed=bytes_accessed,
    )

    resident = lambda i: (0, 0)   # weights/biases stay resident across batch tiles

    out = pl.pallas_call(
        mlp_kernel,
        out_shape=jax.ShapeDtypeStruct((b_pad, out_dim), jnp.float32),
        grid=(n_steps,),
        in_specs=[
            pl.BlockSpec((tb, in_dim), lambda i: (i, 0)),   # x: tiled over batch (13 = full dim)
            pl.BlockSpec((in_dim, hid), resident),          # w1 (13 = full dim)
            pl.BlockSpec((1, hid), resident),               # b1
            pl.BlockSpec((hid, hid), resident),             # w2
            pl.BlockSpec((1, hid), resident),               # b2
            pl.BlockSpec((hid, out_pad), resident),         # w3 (lane-dense padded)
            pl.BlockSpec((1, out_dim), resident),           # b3 (unpadded, full dims)
        ],
        out_specs=pl.BlockSpec((tb, out_dim), lambda i: (i, 0)),
        compiler_params=pltpu.CompilerParams(dimension_semantics=("parallel",)),
        cost_estimate=cost,
    )(x_in, w1p, b1p, w2p, b2p, w3p, b3p)

    return out[:B]


def init_linear(key, in_dim, out_dim):
    # PyTorch nn.Linear default init: U(-1/sqrt(fan_in), 1/sqrt(fan_in)).
    kw, kb = jax.random.split(key)
    bound = 1.0 / jnp.sqrt(jnp.float32(in_dim))
    # Stored already transposed to (in, out) for y = x @ W + b.
    w = jax.random.uniform(kw, (in_dim, out_dim), jnp.float32, -bound, bound)
    b = jax.random.uniform(kb, (1, out_dim), jnp.float32, -bound, bound)
    return w, b


if __name__ == "__main__":
    INPUT_DIM = 13    # CONFIG.N_MFCC
    HIDDEN_DIM = 128
    OUTPUT_DIM = 2    # CONFIG.N_CLASSES
    BATCH = 8

    key = jax.random.PRNGKey(0)
    kx, k1, k2, k3 = jax.random.split(key, 4)

    params = {
        "fc1": init_linear(k1, INPUT_DIM, HIDDEN_DIM),
        "fc2": init_linear(k2, HIDDEN_DIM, HIDDEN_DIM),
        "fc3": init_linear(k3, HIDDEN_DIM, OUTPUT_DIM),
    }
    prepared = jax.tree_util.tree_map(jax.block_until_ready, prepare_params(params))

    x = jax.random.normal(kx, (BATCH, INPUT_DIM), jnp.float32)

    fwd = jax.jit(mlp_forward)
    out = jax.block_until_ready(fwd(x, prepared))

    # Reference 1: same bf16-weight math in pure JAX (tight tolerance; differs from the
    # kernel only by the EUP approximate reciprocal in sigmoid).
    def ref_bf16(x, p):
        xb = x.astype(jnp.bfloat16)
        h = jnp.maximum(
            jnp.dot(xb, p["fc1"][0].astype(jnp.bfloat16),
                    preferred_element_type=jnp.float32) + p["fc1"][1], 0.0
        ).astype(jnp.bfloat16)
        h = jnp.maximum(
            jnp.dot(h, p["fc2"][0].astype(jnp.bfloat16),
                    preferred_element_type=jnp.float32) + p["fc2"][1], 0.0
        ).astype(jnp.bfloat16)
        logits = jnp.dot(h, p["fc3"][0].astype(jnp.bfloat16),
                         preferred_element_type=jnp.float32) + p["fc3"][1]
        return jax.nn.sigmoid(logits)

    # Reference 2: full-f32 PyTorch-equivalent math (loose tolerance for bf16 weights).
    def ref_f32(x, p):
        h = jnp.maximum(x @ p["fc1"][0] + p["fc1"][1], 0.0)
        h = jnp.maximum(h @ p["fc2"][0] + p["fc2"][1], 0.0)
        return jax.nn.sigmoid(h @ p["fc3"][0] + p["fc3"][1])

    assert out.shape == (BATCH, OUTPUT_DIM)
    assert jnp.allclose(out, ref_bf16(x, params), atol=5e-3, rtol=5e-3)
    assert jnp.allclose(out, ref_f32(x, params), atol=5e-2, rtol=5e-2)

    print("KERNEL_OK")
</pallas_src>

<mosaic_0001>
module attributes {stable_mosaic.version = 11 : i64} {
  func.func @mlp_kernel(%arg0: i32, %arg1: memref<8x13xf32, #tpu.memory_space<vmem>>, %arg2: memref<13x128xbf16, #tpu.memory_space<vmem>>, %arg3: memref<1x128xf32, #tpu.memory_space<vmem>>, %arg4: memref<128x128xbf16, #tpu.memory_space<vmem>>, %arg5: memref<1x128xf32, #tpu.memory_space<vmem>>, %arg6: memref<128x128xbf16, #tpu.memory_space<vmem>>, %arg7: memref<1x2xf32, #tpu.memory_space<vmem>>, %arg8: memref<8x2xf32, #tpu.memory_space<vmem>>) attributes {dimension_semantics = [#tpu.dimension_semantics<parallel>], iteration_bounds = array<i64: 1>, scalar_prefetch = 0 : i64, scratch_operands = 0 : i64, tpu.core_type = #tpu.core_type<tc>, window_params = [{transform_indices = @transform_0, window_bounds = array<i64: 8, 13>}, {pipeline_mode = #tpu.pipeline_mode<synchronous>, transform_indices = @transform_1, window_bounds = array<i64: 13, 128>}, {pipeline_mode = #tpu.pipeline_mode<synchronous>, transform_indices = @transform_2, window_bounds = array<i64: 1, 128>}, {pipeline_mode = #tpu.pipeline_mode<synchronous>, transform_indices = @transform_3, window_bounds = array<i64: 128, 128>}, {pipeline_mode = #tpu.pipeline_mode<synchronous>, transform_indices = @transform_4, window_bounds = array<i64: 1, 128>}, {pipeline_mode = #tpu.pipeline_mode<synchronous>, transform_indices = @transform_5, window_bounds = array<i64: 128, 128>}, {pipeline_mode = #tpu.pipeline_mode<synchronous>, transform_indices = @transform_6, window_bounds = array<i64: 1, 2>}, {transform_indices = @transform_7, window_bounds = array<i64: 8, 2>}]} {
    %c0 = arith.constant 0 : index
    %c0_0 = arith.constant 0 : index
    %0 = vector.load %arg1[%c0, %c0_0] : memref<8x13xf32, #tpu.memory_space<vmem>>, vector<8x13xf32>
    %1 = arith.truncf %0 : vector<8x13xf32> to vector<8x13xbf16>
    %c0_1 = arith.constant 0 : index
    %c0_2 = arith.constant 0 : index
    %2 = vector.load %arg2[%c0_1, %c0_2] : memref<13x128xbf16, #tpu.memory_space<vmem>>, vector<13x128xbf16>
    %cst = arith.constant dense<0.000000e+00> : vector<8x128xf32>
    %3 = tpu.matmul %1, %2, %cst {dimension_numbers = #tpu.dot_dimension_numbers<[1], [0], [0], [1], [0, 0, 1, 1], [], []>} : vector<8x13xbf16>, vector<13x128xbf16>, vector<8x128xf32> -> vector<8x128xf32>
    %c0_3 = arith.constant 0 : index
    %c0_4 = arith.constant 0 : index
    %4 = vector.load %arg3[%c0_3, %c0_4] : memref<1x128xf32, #tpu.memory_space<vmem>>, vector<1x128xf32>
    %5 = vector.broadcast %4 : vector<1x128xf32> to vector<8x128xf32>
    %6 = arith.addf %3, %5 : vector<8x128xf32>
    %cst_5 = arith.constant 0.000000e+00 : f32
    %7 = vector.broadcast %cst_5 : f32 to vector<8x128xf32>
    %8 = arith.maximumf %6, %7 : vector<8x128xf32>
    %9 = arith.truncf %8 : vector<8x128xf32> to vector<8x128xbf16>
    %c0_6 = arith.constant 0 : index
    %c0_7 = arith.constant 0 : index
    %10 = vector.load %arg4[%c0_6, %c0_7] : memref<128x128xbf16, #tpu.memory_space<vmem>>, vector<128x128xbf16>
    %cst_8 = arith.constant dense<0.000000e+00> : vector<8x128xf32>
    %11 = tpu.matmul %9, %10, %cst_8 {dimension_numbers = #tpu.dot_dimension_numbers<[1], [0], [0], [1], [0, 0, 1, 1], [], []>} : vector<8x128xbf16>, vector<128x128xbf16>, vector<8x128xf32> -> vector<8x128xf32>
    %c0_9 = arith.constant 0 : index
    %c0_10 = arith.constant 0 : index
    %12 = vector.load %arg5[%c0_9, %c0_10] : memref<1x128xf32, #tpu.memory_space<vmem>>, vector<1x128xf32>
    %13 = vector.broadcast %12 : vector<1x128xf32> to vector<8x128xf32>
    %14 = arith.addf %11, %13 : vector<8x128xf32>
    %cst_11 = arith.constant 0.000000e+00 : f32
    %15 = vector.broadcast %cst_11 : f32 to vector<8x128xf32>
    %16 = arith.maximumf %14, %15 : vector<8x128xf32>
    %17 = arith.truncf %16 : vector<8x128xf32> to vector<8x128xbf16>
    %c0_12 = arith.constant 0 : index
    %c0_13 = arith.constant 0 : index
    %18 = vector.load %arg6[%c0_12, %c0_13] : memref<128x128xbf16, #tpu.memory_space<vmem>>, vector<128x128xbf16>
    %cst_14 = arith.constant dense<0.000000e+00> : vector<8x128xf32>
    %19 = tpu.matmul %17, %18, %cst_14 {dimension_numbers = #tpu.dot_dimension_numbers<[1], [0], [0], [1], [0, 0, 1, 1], [], []>} : vector<8x128xbf16>, vector<128x128xbf16>, vector<8x128xf32> -> vector<8x128xf32>
    %20 = vector.extract_strided_slice %19 {offsets = [0, 0], sizes = [8, 2], strides = [1, 1]} : vector<8x128xf32> to vector<8x2xf32>
    %c0_15 = arith.constant 0 : index
    %c0_16 = arith.constant 0 : index
    %21 = vector.load %arg7[%c0_15, %c0_16] : memref<1x2xf32, #tpu.memory_space<vmem>>, vector<1x2xf32>
    %22 = vector.broadcast %21 : vector<1x2xf32> to vector<8x2xf32>
    %23 = arith.addf %20, %22 : vector<8x2xf32>
    %cst_17 = arith.constant 0.000000e+00 : f32
    %24 = vector.broadcast %cst_17 : f32 to vector<8x2xf32>
    %25 = arith.subf %24, %23 : vector<8x2xf32>
    %26 = math.exp %25 : vector<8x2xf32>
    %cst_18 = arith.constant 1.000000e+00 : f32
    %27 = vector.broadcast %cst_18 : f32 to vector<8x2xf32>
    %28 = arith.addf %27, %26 : vector<8x2xf32>
    %29 = tpu.reciprocal %28 {approx = true} : vector<8x2xf32> -> vector<8x2xf32>
    %c0_19 = arith.constant 0 : index
    %c0_20 = arith.constant 0 : index
    %30 = vector.load %arg8[%c0_19, %c0_20] : memref<8x2xf32, #tpu.memory_space<vmem>>, vector<8x2xf32>
    tpu.vector_store %arg8[%c0_19, %c0_20], %29 {strides = array<i32>} : memref<8x2xf32, #tpu.memory_space<vmem>>, vector<8x2xf32>,
    return
  }
  func.func @transform_0(%arg0: i32) -> (i32, i32) {
    %c0_i32 = arith.constant 0 : i32
    %c0_i32_0 = arith.constant 0 : i32
    return %arg0, %c0_i32 : i32, i32
  }
  func.func @transform_1(%arg0: i32) -> (i32, i32) {
    %c0_i32 = arith.constant 0 : i32
    %c0_i32_0 = arith.constant 0 : i32
    %c0_i32_1 = arith.constant 0 : i32
    return %c0_i32, %c0_i32_0 : i32, i32
  }
  func.func @transform_2(%arg0: i32) -> (i32, i32) {
    %c0_i32 = arith.constant 0 : i32
    %c0_i32_0 = arith.constant 0 : i32
    %c0_i32_1 = arith.constant 0 : i32
    return %c0_i32, %c0_i32_0 : i32, i32
  }
  func.func @transform_3(%arg0: i32) -> (i32, i32) {
    %c0_i32 = arith.constant 0 : i32
    %c0_i32_0 = arith.constant 0 : i32
    %c0_i32_1 = arith.constant 0 : i32
    return %c0_i32, %c0_i32_0 : i32, i32
  }
  func.func @transform_4(%arg0: i32) -> (i32, i32) {
    %c0_i32 = arith.constant 0 : i32
    %c0_i32_0 = arith.constant 0 : i32
    %c0_i32_1 = arith.constant 0 : i32
    return %c0_i32, %c0_i32_0 : i32, i32
  }
  func.func @transform_5(%arg0: i32) -> (i32, i32) {
    %c0_i32 = arith.constant 0 : i32
    %c0_i32_0 = arith.constant 0 : i32
    %c0_i32_1 = arith.constant 0 : i32
    return %c0_i32, %c0_i32_0 : i32, i32
  }
  func.func @transform_6(%arg0: i32) -> (i32, i32) {
    %c0_i32 = arith.constant 0 : i32
    %c0_i32_0 = arith.constant 0 : i32
    %c0_i32_1 = arith.constant 0 : i32
    return %c0_i32, %c0_i32_0 : i32, i32
  }
  func.func @transform_7(%arg0: i32) -> (i32, i32) {
    %c0_i32 = arith.constant 0 : i32
    %c0_i32_0 = arith.constant 0 : i32
    return %arg0, %c0_i32 : i32, i32
  }
}

</mosaic_0001>

<llo_original>
// kernel: mlp_forward.1
$region0: #{mlp_forward.1}
  #allocation0 [shape = 'u32[]', space=smem, size = 0x4, offset = 0x4, fixed_abs, tag = 'smem constant byte address 0x4 - core index']
  #allocation1 [shape = 'u32[144,128]{1,0:T(1,128)}', space=vmem, size = 0x12000, scoped, tag = 'internal scratch']
  %s0 = inlined_call_operand.hbm [shape: f32[8,13], index: 0, kind: input, shape index: {}]
  %s1 = inlined_call_operand.vmem [shape: bf16[13,128], index: 1, kind: input, shape index: {}]
  %s2 = inlined_call_operand.vmem [shape: f32[1,128], index: 2, kind: input, shape index: {}]
  %s3 = inlined_call_operand.hbm [shape: bf16[128,128], index: 3, kind: input, shape index: {}]
  %s4 = inlined_call_operand.vmem [shape: f32[1,128], index: 4, kind: input, shape index: {}]
  %s5 = inlined_call_operand.hbm [shape: bf16[128,128], index: 5, kind: input, shape index: {}]
  %s6 = inlined_call_operand.vmem [shape: f32[1,2], index: 6, kind: input, shape index: {}]
  %s7 = inlined_call_operand.vmem [shape: f32[8,2], index: 7, kind: output, shape index: {}]
  %s8 = sld [smem:[#allocation0]]
  $region50: #{mlp_forward.1} parent=0
    _
  %s10 = ssub.s32 1, %s8
  %s11 = scalar_select 0, %s10, %s8
  $region1: #{mlp_forward.1} parent=0
    #allocation2 [shape = 'u8[4096]{0}', space=vmem, size = 0x1000, scoped, tag = 'input window, operand 0, single buffered']
    #allocation3 [shape = 's32[1]{0}', space=sflag, size = 0x4, scoped, tag = 'scoped memory for mlp_forward.1']
    #allocation4 [shape = 'u8[32768]{0}', space=vmem, size = 0x8000, scoped, tag = 'input window, operand 3, single buffered']
    #allocation5 [shape = 's32[1]{0}', space=sflag, size = 0x4, scoped, tag = 'scoped memory for mlp_forward.1']
    #allocation6 [shape = 'u8[32768]{0}', space=vmem, size = 0x8000, scoped, tag = 'input window, operand 5, single buffered']
    %12 = vsyncpa [#allocation3], 0
    %13 = vsyncpa [#allocation5], 0
    // Predicated region
    $region2: #{mlp_forward.1} parent=1 // pred_check
      _
    $region3: #{mlp_forward.1} parent=1 // pred_check_branch
      %15 = sbr.rel (0) target = $region5
    $region4: #{mlp_forward.1} parent=1 // pred_region
      %s17 = ssub.s32 128, 128
      %18 = vsyncadd [#allocation3], %s17
      %s20 = sshll.u32 [#allocation2], 4
      %s21 = int_to_ptr.vmem [resolvable:$true] %s20
      %23 = dma.hbm_to_vmem [thread:$0]  %s0, 128, %s21, [#allocation3]
    $region5: #{mlp_forward.1} parent=1 // pred_fallthru
      _
    // Predicated region
    $region6: #{mlp_forward.1} parent=1 // pred_check
      _
    $region7: #{mlp_forward.1} parent=1 // pred_check_branch
      %25 = sbr.rel (0) target = $region9
    $region8: #{mlp_forward.1} parent=1 // pred_region
      _
    $region9: #{mlp_forward.1} parent=1 // pred_fallthru
      _
    // Predicated region
    $region10: #{mlp_forward.1} parent=1 // pred_check
      _
    $region11: #{mlp_forward.1} parent=1 // pred_check_branch
      %27 = sbr.rel (0) target = $region13
    $region12: #{mlp_forward.1} parent=1 // pred_region
      _
    $region13: #{mlp_forward.1} parent=1 // pred_fallthru
      _
    // Predicated region
    $region14: #{mlp_forward.1} parent=1 // pred_check
      _
    $region15: #{mlp_forward.1} parent=1 // pred_check_branch
      %29 = sbr.rel (0) target = $region17
    $region16: #{mlp_forward.1} parent=1 // pred_region
      %s31 = ssub.s32 1024, 1024
      %32 = vsyncadd [#allocation5], %s31
      %s33 = sshll.u32 [#allocation4], 4
      %s34 = int_to_ptr.vmem [resolvable:$true] %s33
      %39 = dma.hbm_to_vmem [thread:$0]  %s3, 1024, %s34, [#allocation5], 64, 64, 4
    $region17: #{mlp_forward.1} parent=1 // pred_fallthru
      _
    // Predicated region
    $region18: #{mlp_forward.1} parent=1 // pred_check
      _
    $region19: #{mlp_forward.1} parent=1 // pred_check_branch
      %41 = sbr.rel (0) target = $region21
    $region20: #{mlp_forward.1} parent=1 // pred_region
      _
    $region21: #{mlp_forward.1} parent=1 // pred_fallthru
      _
    // Predicated region
    $region22: #{mlp_forward.1} parent=1 // pred_check
      _
    $region23: #{mlp_forward.1} parent=1 // pred_check_branch
      %43 = sbr.rel (0) target = $region25
    $region24: #{mlp_forward.1} parent=1 // pred_region
      %s45 = ssub.s32 1024, 1024
      %46 = vsyncadd [#allocation5], %s45
      %s47 = sshll.u32 [#allocation6], 4
      %s48 = int_to_ptr.vmem [resolvable:$true] %s47
      %53 = dma.hbm_to_vmem [thread:$0]  %s5, 1024, %s48, [#allocation5], 64, 64, 4
    $region25: #{mlp_forward.1} parent=1 // pred_fallthru
      _
    // Predicated region
    $region26: #{mlp_forward.1} parent=1 // pred_check
      _
    $region27: #{mlp_forward.1} parent=1 // pred_check_branch
      %55 = sbr.rel (0) target = $region29
    $region28: #{mlp_forward.1} parent=1 // pred_region
      _
    $region29: #{mlp_forward.1} parent=1 // pred_fallthru
      _
    // Predicated region
    $region30: #{mlp_forward.1} parent=1 // pred_check
      _
    $region31: #{mlp_forward.1} parent=1 // pred_check_branch
      %57 = sbr.rel (0) target = $region33
    $region32: #{mlp_forward.1} parent=1 // pred_region
      %58 = dma.done [#allocation3], 128
    $region33: #{mlp_forward.1} parent=1 // pred_fallthru
      _
    // Predicated region
    $region34: #{mlp_forward.1} parent=1 // pred_check
      _
    $region35: #{mlp_forward.1} parent=1 // pred_check_branch
      %60 = sbr.rel (0) target = $region37
    $region36: #{mlp_forward.1} parent=1 // pred_region
      %61 = dma.done [#allocation5], 1024
    $region37: #{mlp_forward.1} parent=1 // pred_fallthru
      _
    // Predicated region
    $region38: #{mlp_forward.1} parent=1 // pred_check
      _
    $region39: #{mlp_forward.1} parent=1 // pred_check_branch
      %63 = sbr.rel (0) target = $region41
    $region40: #{mlp_forward.1} parent=1 // pred_region
      %64 = dma.done [#allocation5], 1024
    $region41: #{mlp_forward.1} parent=1 // pred_fallthru
      _
    %v66 = vld [vmem:[#allocation2] sm:$0xff]
    %v67 = vpack.c.bf16 %v66, %v66
    %v68 = vld [vmem:[%s1] sm:$0xf]
    %v69 = vld [vmem:[%s1 + $0x4] sm:$0x7]
    %v70 = vld [vmem:[%s2] sm:$0x1]
    %v72 = vlaneseq
    %v73 = vshrl.u32 %v72, 7
    %v74 = vsub.s32 0, %v73
    %v75 = vrot.slane %v70, %v74
    %v79 = vunpack.c.l.b16 %v68
    %v80 = vunpack.c.l.b16 %v69
    %v81 = vpack.c.b16 %v80, %v79
    %vm82 = vcmask 105472
    %v84 = vsel %vm82, %v67, 0
    %vm86 = vcmask 1045504
    %vm87 = vcmask 1046528
    %v88 = vsel %vm86, 4294967295, 65535
    %v89 = vsel %vm87, %v88, 0
    %v91 = vand.u32 %v81, %v89
    %93 = vmatprep.subr.bf16.mxu0 0
    %94 = vmatpush1.bf16.msra.mxu0 %v91
    %95 = vmatprep.subr.bf16.mxu0 0
    %96 = vmatpush1.bf16.msra.mxu0 0
    %97 = vmatprep.subr.bf16.mxu0 0
    %98 = vmatpush1.bf16.msra.mxu0 0
    %99 = vmatprep.subr.bf16.mxu0 0
    %100 = vmatpush1.bf16.msra.mxu0 0
    %101 = vmatprep.subr.bf16.mxu0 0
    %102 = vmatpush1.bf16.msra.mxu0 0
    %103 = vmatprep.subr.bf16.mxu0 0
    %104 = vmatpush1.bf16.msra.mxu0 0
    %105 = vmatprep.subr.bf16.mxu0 0
    %106 = vmatpush1.bf16.msra.mxu0 0
    %107 = vmatprep.subr.bf16.mxu0 0
    %108 = vmatpush1.bf16.msra.mxu0 0
    %109 = vmatprep.subr.bf16.mxu0 0
    %110 = vmatpush1.bf16.msra.mxu0 0
    %111 = vmatprep.subr.bf16.mxu0 0
    %112 = vmatpush1.bf16.msra.mxu0 0
    %113 = vmatprep.subr.bf16.mxu0 0
    %114 = vmatpush1.bf16.msra.mxu0 0
    %115 = vmatprep.subr.bf16.mxu0 0
    %116 = vmatpush1.bf16.msra.mxu0 0
    %117 = vmatprep.subr.bf16.mxu0 0
    %118 = vmatpush1.bf16.msra.mxu0 0
    %119 = vmatprep.subr.bf16.mxu0 0
    %120 = vmatpush1.bf16.msra.mxu0 0
    %121 = vmatprep.subr.bf16.mxu0 0
    %122 = vmatpush1.bf16.msra.mxu0 0
    %123 = vmatprep.subr.bf16.mxu0 0
    %124 = vmatpush1.bf16.msra.mxu0 0
    %125 = vmatprep.mubr.bf16.mxu0 0
    %126 = vmatmul.mubr.bf16.gmra.mrb[0].mxu0 %v84
    %v127 = vpop.f32.mrb[0].mxu0
    %v128 = vadd.f32 %v75, %v127
    %v129 = vpop.f32.mrb[0].mxu0
    %v130 = vpop.f32.mrb[0].mxu0
    %v131 = vpop.f32.mrb[0].mxu0
    %132 = vdwg.mxu0
    %v133 = vmax.f32 %v128, 0.0
    %v134 = vpack.c.bf16 %v133, %v133
    %v135 = vld [vmem:[#allocation4] sm:$0xf]
    %v136 = vld [vmem:[#allocation4 + $0x4] sm:$0xf]
    %v137 = vld [vmem:[#allocation4 + $0x8] sm:$0xf]
    %v138 = vld [vmem:[#allocation4 + $0xc] sm:$0xf]
    %v139 = vld [vmem:[#allocation4 + $0x10] sm:$0xf]
    %v140 = vld [vmem:[#allocation4 + $0x14] sm:$0xf]
    %v141 = vld [vmem:[#allocation4 + $0x18] sm:$0xf]
    %v142 = vld [vmem:[#allocation4 + $0x1c] sm:$0xf]
    %v143 = vld [vmem:[#allocation4 + $0x20] sm:$0xf]
    %v144 = vld [vmem:[#allocation4 + $0x24] sm:$0xf]
    %v145 = vld [vmem:[#allocation4 + $0x28] sm:$0xf]
    %v146 = vld [vmem:[#allocation4 + $0x2c] sm:$0xf]
    %v147 = vld [vmem:[#allocation4 + $0x30] sm:$0xf]
    %v148 = vld [vmem:[#allocation4 + $0x34] sm:$0xf]
    %v149 = vld [vmem:[#allocation4 + $0x38] sm:$0xf]
    %v150 = vld [vmem:[#allocation4 + $0x3c] sm:$0xf]
    %v151 = vld [vmem:[%s4] sm:$0x1]
    %v153 = vlaneseq
    %v154 = vshrl.u32 %v153, 7
    %v155 = vsub.s32 0, %v154
    %v156 = vrot.slane %v151, %v155
    %v174 = vunpack.c.l.b16 %v135
    %v175 = vunpack.c.l.b16 %v136
    %v176 = vunpack.c.l.b16 %v137
    %v177 = vunpack.c.l.b16 %v138
    %v178 = vunpack.c.l.b16 %v139
    %v179 = vunpack.c.l.b16 %v140
    %v180 = vunpack.c.l.b16 %v141
    %v181 = vunpack.c.l.b16 %v142
    %v182 = vunpack.c.l.b16 %v143
    %v183 = vunpack.c.l.b16 %v144
    %v184 = vunpack.c.l.b16 %v145
    %v185 = vunpack.c.l.b16 %v146
    %v186 = vunpack.c.l.b16 %v147
    %v187 = vunpack.c.l.b16 %v148
    %v188 = vunpack.c.l.b16 %v149
    %v189 = vunpack.c.l.b16 %v150
    %v190 = vpack.c.b16 %v175, %v174
    %v191 = vpack.c.b16 %v177, %v176
    %v192 = vpack.c.b16 %v179, %v178
    %v193 = vpack.c.b16 %v181, %v180
    %v194 = vpack.c.b16 %v183, %v182
    %v195 = vpack.c.b16 %v185, %v184
    %v196 = vpack.c.b16 %v187, %v186
    %v197 = vpack.c.b16 %v189, %v188
    %206 = vmatprep.subr.bf16.mxu0 0
    %207 = vmatpush1.bf16.msra.mxu0 %v190
    %208 = vmatprep.subr.bf16.mxu0 0
    %209 = vmatpush1.bf16.msra.mxu0 %v191
    %210 = vmatprep.subr.bf16.mxu0 0
    %211 = vmatpush1.bf16.msra.mxu0 %v192
    %212 = vmatprep.subr.bf16.mxu0 0
    %213 = vmatpush1.bf16.msra.mxu0 %v193
    %214 = vmatprep.subr.bf16.mxu0 0
    %215 = vmatpush1.bf16.msra.mxu0 %v194
    %216 = vmatprep.subr.bf16.mxu0 0
    %217 = vmatpush1.bf16.msra.mxu0 %v195
    %218 = vmatprep.subr.bf16.mxu0 0
    %219 = vmatpush1.bf16.msra.mxu0 %v196
    %220 = vmatprep.subr.bf16.mxu0 0
    %221 = vmatpush1.bf16.msra.mxu0 %v197
    %222 = vmatprep.subr.bf16.mxu0 0
    %223 = vmatpush1.bf16.msra.mxu0 0
    %224 = vmatprep.subr.bf16.mxu0 0
    %225 = vmatpush1.bf16.msra.mxu0 0
    %226 = vmatprep.subr.bf16.mxu0 0
    %227 = vmatpush1.bf16.msra.mxu0 0
    %228 = vmatprep.subr.bf16.mxu0 0
    %229 = vmatpush1.bf16.msra.mxu0 0
    %230 = vmatprep.subr.bf16.mxu0 0
    %231 = vmatpush1.bf16.msra.mxu0 0
    %232 = vmatprep.subr.bf16.mxu0 0
    %233 = vmatpush1.bf16.msra.mxu0 0
    %234 = vmatprep.subr.bf16.mxu0 0
    %235 = vmatpush1.bf16.msra.mxu0 0
    %236 = vmatprep.subr.bf16.mxu0 0
    %237 = vmatpush1.bf16.msra.mxu0 0
    %238 = vmatprep.mubr.bf16.mxu0 0
    %239 = vmatmul.mubr.bf16.gmra.mrb[0].mxu0 %v134
    %v240 = vpop.f32.mrb[0].mxu0
    %v241 = vadd.f32 %v156, %v240
    %v242 = vpop.f32.mrb[0].mxu0
    %v243 = vpop.f32.mrb[0].mxu0
    %v244 = vpop.f32.mrb[0].mxu0
    %245 = vdwg.mxu0
    %v246 = vmax.f32 %v241, 0.0
    %v247 = vpack.c.bf16 %v246, %v246
    %v248 = vld [vmem:[#allocation6] sm:$0xf]
    %v249 = vld [vmem:[#allocation6 + $0x4] sm:$0xf]
    %v250 = vld [vmem:[#allocation6 + $0x8] sm:$0xf]
    %v251 = vld [vmem:[#allocation6 + $0xc] sm:$0xf]
    %v252 = vld [vmem:[#allocation6 + $0x10] sm:$0xf]
    %v253 = vld [vmem:[#allocation6 + $0x14] sm:$0xf]
    %v254 = vld [vmem:[#allocation6 + $0x18] sm:$0xf]
    %v255 = vld [vmem:[#allocation6 + $0x1c] sm:$0xf]
    %v256 = vld [vmem:[#allocation6 + $0x20] sm:$0xf]
    %v257 = vld [vmem:[#allocation6 + $0x24] sm:$0xf]
    %v258 = vld [vmem:[#allocation6 + $0x28] sm:$0xf]
    %v259 = vld [vmem:[#allocation6 + $0x2c] sm:$0xf]
    %v260 = vld [vmem:[#allocation6 + $0x30] sm:$0xf]
    %v261 = vld [vmem:[#allocation6 + $0x34] sm:$0xf]
    %v262 = vld [vmem:[#allocation6 + $0x38] sm:$0xf]
    %v263 = vld [vmem:[#allocation6 + $0x3c] sm:$0xf]
    %v280 = vunpack.c.l.b16 %v248
    %v281 = vunpack.c.l.b16 %v249
    %v282 = vunpack.c.l.b16 %v250
    %v283 = vunpack.c.l.b16 %v251
    %v284 = vunpack.c.l.b16 %v252
    %v285 = vunpack.c.l.b16 %v253
    %v286 = vunpack.c.l.b16 %v254
    %v287 = vunpack.c.l.b16 %v255
    %v288 = vunpack.c.l.b16 %v256
    %v289 = vunpack.c.l.b16 %v257
    %v290 = vunpack.c.l.b16 %v258
    %v291 = vunpack.c.l.b16 %v259
    %v292 = vunpack.c.l.b16 %v260
    %v293 = vunpack.c.l.b16 %v261
    %v294 = vunpack.c.l.b16 %v262
    %v295 = vunpack.c.l.b16 %v263
    %v296 = vpack.c.b16 %v281, %v280
    %v297 = vpack.c.b16 %v283, %v282
    %v298 = vpack.c.b16 %v285, %v284
    %v299 = vpack.c.b16 %v287, %v286
    %v300 = vpack.c.b16 %v289, %v288
    %v301 = vpack.c.b16 %v291, %v290
    %v302 = vpack.c.b16 %v293, %v292
    %v303 = vpack.c.b16 %v295, %v294
    %312 = vmatprep.subr.bf16.mxu0 0
    %313 = vmatpush1.bf16.msra.mxu0 %v296
    %314 = vmatprep.subr.bf16.mxu0 0
    %315 = vmatpush1.bf16.msra.mxu0 %v297
    %316 = vmatprep.subr.bf16.mxu0 0
    %317 = vmatpush1.bf16.msra.mxu0 %v298
    %318 = vmatprep.subr.bf16.mxu0 0
    %319 = vmatpush1.bf16.msra.mxu0 %v299
    %320 = vmatprep.subr.bf16.mxu0 0
    %321 = vmatpush1.bf16.msra.mxu0 %v300
    %322 = vmatprep.subr.bf16.mxu0 0
    %323 = vmatpush1.bf16.msra.mxu0 %v301
    %324 = vmatprep.subr.bf16.mxu0 0
    %325 = vmatpush1.bf16.msra.mxu0 %v302
    %326 = vmatprep.subr.bf16.mxu0 0
    %327 = vmatpush1.bf16.msra.mxu0 %v303
    %328 = vmatprep.subr.bf16.mxu0 0
    %329 = vmatpush1.bf16.msra.mxu0 0
    %330 = vmatprep.subr.bf16.mxu0 0
    %331 = vmatpush1.bf16.msra.mxu0 0
    %332 = vmatprep.subr.bf16.mxu0 0
    %333 = vmatpush1.bf16.msra.mxu0 0
    %334 = vmatprep.subr.bf16.mxu0 0
    %335 = vmatpush1.bf16.msra.mxu0 0
    %336 = vmatprep.subr.bf16.mxu0 0
    %337 = vmatpush1.bf16.msra.mxu0 0
    %338 = vmatprep.subr.bf16.mxu0 0
    %339 = vmatpush1.bf16.msra.mxu0 0
    %340 = vmatprep.subr.bf16.mxu0 0
    %341 = vmatpush1.bf16.msra.mxu0 0
    %342 = vmatprep.subr.bf16.mxu0 0
    %343 = vmatpush1.bf16.msra.mxu0 0
    %344 = vmatprep.mubr.bf16.mxu0 0
    %345 = vmatmul.mubr.bf16.gmra.mrb[0].mxu0 %v247
    %v346 = vpop.f32.mrb[0].mxu0
    %v347 = vadd.f32 0.0, %v346
    %v348 = vpop.f32.mrb[0].mxu0
    %v349 = vpop.f32.mrb[0].mxu0
    %v350 = vpop.f32.mrb[0].mxu0
    %351 = vdwg.mxu0
    %v352 = vld [vmem:[%s6] sm:$0x1]
    %v354 = vlaneseq
    %v355 = vshrl.u32 %v354, 7
    %v356 = vsub.s32 0, %v355
    %v357 = vrot.slane %v352, %v356
    %v359 = vadd.f32 %v347, %v357
    %v360 = vsub.f32 0.0, %v359
    %v361 = vmul.f32 %v360, 1.442695
    %v362 = vpow.pop %v361
    %v363 = vadd.f32 %v362, 1.0
    %v364 = vrcp.pop %v363
    %vm365 = vcmask 15360
    %366 = vst.msk [vmem:[%s7] sm:$0xff] %vm365, %v364
    // Predicated region
    $region42: #{mlp_forward.1} parent=1 // pred_check
      _
    $region43: #{mlp_forward.1} parent=1 // pred_check_branch
      %368 = sbr.rel (0) target = $region45
    $region44: #{mlp_forward.1} parent=1 // pred_region
      _
    $region45: #{mlp_forward.1} parent=1 // pred_fallthru
      _
    // Predicated region
    $region46: #{mlp_forward.1} parent=1 // pred_check
      _
    $region47: #{mlp_forward.1} parent=1 // pred_check_branch
      %370 = sbr.rel (0) target = $region49
    $region48: #{mlp_forward.1} parent=1 // pred_region
      _
    $region49: #{mlp_forward.1} parent=1 // pred_fallthru
      _
    %371 = vsyncpa [#allocation3], 1
    %372 = vsyncpa [#allocation5], 1

</llo_original>
